<compile_context>
chip_gen: v7x
topology: tpu7x:2x2x1
jax: 0.10.0
libtpu: 0.0.40
codegen_flags: <defaults>
</compile_context>

<pallas_src>
import jax
import jax.numpy as jnp
from jax.experimental import pallas as pl
from jax.experimental.pallas import tpu as pltpu

SHARPE_W = 0.1
SORTINO_W = 0.1
DRAWDOWN_W = 0.1
VOLATILITY_W = 0.1
EPS = 1e-6

_N_PARTIALS = 5  # ssq, sharpe_sum, sortino_sum, drawdown_sum, std_sum


def _shift_right_zero(x, k):
    """y[:, i] = x[:, i-k] for i >= k, 0 for i < k (static 1 <= k < S)."""
    pad = jnp.zeros(x.shape[:-1] + (k,), dtype=x.dtype)
    return jnp.concatenate([pad, x[:, : x.shape[-1] - k]], axis=-1)


def _max_drawdown(r, lane_idx):
    """Per-row max drawdown via ONE fused (prefix_sum, running_peak) scan.

    Pair state per position: s = segment sum, m = max prefix sum of segment.
    Combine (A before B): s = s_A + s_B, m = max(m_A, s_A + m_B).
    After the inclusive scan s[t] = cumsum(r)[t], m[t] = running peak, so
    max drawdown = max_t(m[t] - s[t]).  log2(S) steps, mask computed once per
    shift and shared by both components.

    TODO(synk): for very long sequences a two-level scan (intra-128-lane +
    carry combine) and MXU offload of the row reductions would further cut
    XLU work; omitted here to keep one robust code path.
    """
    s = r
    m = r
    seq = r.shape[-1]
    k = 1
    while k < seq:
        valid = lane_idx >= k
        s_prev = _shift_right_zero(s, k)
        m_prev = _shift_right_zero(m, k)
        new_s = jnp.where(valid, s_prev + s, s)
        new_m = jnp.where(valid, jnp.maximum(m_prev, s_prev + m), m)
        s, m = new_s, new_m
        k *= 2
    return jnp.max(m - s, axis=1, keepdims=True)  # [TB, 1], >= 0 by construction


def _block_partials(pred, true, r):
    """Un-normalized partial sums for one [TB, S] batch block (all float32)."""
    seq_fin = r.shape[1]

    # ---- base MSE: sum of squared errors (normalized by B*S in the wrapper) ----
    diff = pred - true
    ssq = jnp.sum(diff * diff)

    # ---- per-row statistics of the financial returns ----
    mean_r = jnp.mean(r, axis=1, keepdims=True)                        # [TB, 1]
    centered = r - mean_r
    # Unbiased std, matching torch.std(dim=1).
    # TODO(synk): S == 1 is NaN in torch; guarded here to stay finite.
    ddof_den = max(seq_fin - 1, 1)
    var_unbiased = jnp.sum(centered * centered, axis=1, keepdims=True) / ddof_den
    std_r = jnp.sqrt(var_unbiased)                                     # [TB, 1]

    # Sharpe: mean / (std + eps)  (exact division for reference parity)
    sharpe_sum = jnp.sum(mean_r / (std_r + EPS))

    # Sortino: mean / sqrt(mean(min(r, 0)^2) + eps)
    downside = jnp.minimum(r, 0.0)
    downside_dev = jnp.sqrt(jnp.mean(downside * downside, axis=1, keepdims=True) + EPS)
    sortino_sum = jnp.sum(mean_r / downside_dev)

    # Max drawdown (fused pair scan); lane iota computed once and reused.
    lane_idx = jax.lax.broadcasted_iota(jnp.int32, r.shape, dimension=1)
    dd_sum = jnp.sum(_max_drawdown(r, lane_idx))

    # Volatility: per-row unbiased std.
    std_sum = jnp.sum(std_r)

    return ssq, sharpe_sum, sortino_sum, dd_sum, std_sum


def _store_partials(out_ref, partials):
    """Write the 5 partial sums into this block's lane-dense (8, 128) slab."""
    row_idx = jax.lax.broadcasted_iota(jnp.int32, (8, 128), dimension=0)
    slab = jnp.zeros((8, 128), jnp.float32)
    for j, v in enumerate(partials):
        slab = slab + jnp.where(row_idx == j, v.astype(jnp.float32), 0.0)
    out_ref[0] = slab


def _make_kernel(has_fin):
    if has_fin:
        def kernel(pred_ref, true_ref, fin_ref, out_ref):
            pred = pred_ref[...].astype(jnp.float32)
            true = true_ref[...].astype(jnp.float32)
            r = fin_ref[...].astype(jnp.float32)
            _store_partials(out_ref, _block_partials(pred, true, r))
    else:
        def kernel(pred_ref, true_ref, out_ref):
            pred = pred_ref[...].astype(jnp.float32)   # cast once, reused as r
            true = true_ref[...].astype(jnp.float32)
            _store_partials(out_ref, _block_partials(pred, true, pred))
    return kernel


def _vmem_caps():
    """(pipeline working-set budget, explicit scoped-VMEM limit) in bytes."""
    try:
        cap = int(pltpu.get_tpu_info().vmem_capacity_bytes)
    except Exception:
        cap = 64 * 1024 * 1024  # conservative default (v7x per-TensorCore VMEM)
    # v5e/v6e (128 MiB physical) -> 48 MiB working set, 64 MiB scoped limit.
    # v7x     ( 64 MiB physical) -> 24 MiB working set, 32 MiB scoped limit.
    return (cap * 3) // 8, cap // 2


def _choose_batch_tile(batch, seq_pred, seq_fin, n_inputs, itemsize, budget):
    # Double-buffered input blocks streamed by the BlockSpec pipeline.
    per_row_in = 2 * itemsize * (2 * seq_pred + (seq_fin if n_inputs == 3 else 0))
    # In-kernel f32 working set: casts + diff/centered on the pred axis, and
    # r + fused-scan state / shifted temporaries + int32 lane iota on the
    # financial axis (roughly counted, erring on the large side).
    per_row_work = 4 * 4 * seq_pred + 8 * 4 * seq_fin
    per_row = max(1, per_row_in + per_row_work)
    tb = budget // per_row
    tb = min(1024, tb)            # per-step overhead amortized by ~512-1024 rows
    tb = max(8, tb - (tb % 8))    # sublane-aligned
    if tb >= batch:
        return batch, 1           # single block; block dims == full array dims
    nb = -(-batch // tb)
    return tb, nb


def financial_regularizer_loss(pred_returns, true_returns, true_next_returns=None):
    """Combined financial regularizer loss. Returns a scalar float32."""
    if pred_returns.shape != true_returns.shape:
        raise ValueError("pred_returns and true_returns must have the same shape")
    B, S_pred = pred_returns.shape
    has_fin = true_next_returns is not None

    inputs = [pred_returns, true_returns]
    if has_fin:
        inputs.append(true_next_returns)
    seq_fin = inputs[-1].shape[1] if has_fin else S_pred

    itemsize = max(jnp.dtype(x.dtype).itemsize for x in inputs)
    budget, vmem_limit = _vmem_caps()
    tb, nb = _choose_batch_tile(B, S_pred, seq_fin, len(inputs), itemsize, budget)

    # Ragged batch: zero-pad to a multiple of the tile.  Zero rows contribute
    # exactly 0 to every partial sum (mean = std = drawdown = 0), and the
    # normalization below always uses the true B.
    b_pad = tb * nb
    if b_pad != B:
        inputs = [jnp.pad(x, ((0, b_pad - x.shape[0]), (0, 0))) for x in inputs]

    in_specs = [pl.BlockSpec((tb, x.shape[1]), lambda i: (i, 0)) for x in inputs]

    part_out = pl.pallas_call(
        _make_kernel(has_fin),
        out_shape=jax.ShapeDtypeStruct((nb, 8, 128), jnp.float32),
        grid=(nb,),
        in_specs=in_specs,
        out_specs=pl.BlockSpec((1, 8, 128), lambda i: (i, 0, 0)),
        compiler_params=pltpu.CompilerParams(
            dimension_semantics=("parallel",),   # independent per-block partials
            vmem_limit_bytes=vmem_limit,
        ),
    )(*inputs)

    sums = jnp.sum(part_out[:, :_N_PARTIALS, 0], axis=0)  # [5]
    ssq = sums[0]
    sharpe_s = sums[1]
    sortino_s = sums[2]
    dd_s = sums[3]
    std_s = sums[4]

    inv_b = 1.0 / B
    base_loss = ssq / (B * S_pred)
    return (base_loss
            - SHARPE_W * sharpe_s * inv_b
            - SORTINO_W * sortino_s * inv_b
            + DRAWDOWN_W * dd_s * inv_b
            + VOLATILITY_W * std_s * inv_b)


if __name__ == "__main__":
    key = jax.random.PRNGKey(0)
    k1, k2, k3 = jax.random.split(key, 3)
    B, S = 2, 8
    pred_returns = 0.01 * jax.random.normal(k1, (B, S), dtype=jnp.float32)
    true_returns = 0.01 * jax.random.normal(k2, (B, S), dtype=jnp.float32)
    true_next_returns = 0.01 * jax.random.normal(k3, (B, S), dtype=jnp.float32)

    # 2-input path (financial metrics computed from pred_returns itself).
    loss_a = financial_regularizer_loss(pred_returns, true_returns)
    # 3-input path (explicit future returns).
    loss_b = financial_regularizer_loss(pred_returns, true_returns, true_next_returns)

    jax.block_until_ready(loss_a)
    jax.block_until_ready(loss_b)
    print("KERNEL_OK")
</pallas_src>

<mosaic_0001>
module attributes {stable_mosaic.version = 11 : i64} {
  func.func @kernel(%arg0: i32, %arg1: memref<2x8xf32, #tpu.memory_space<vmem>>, %arg2: memref<2x8xf32, #tpu.memory_space<vmem>>, %arg3: memref<1x8x128xf32, #tpu.memory_space<vmem>>) attributes {dimension_semantics = [#tpu.dimension_semantics<parallel>], iteration_bounds = array<i64: 1>, scalar_prefetch = 0 : i64, scratch_operands = 0 : i64, tpu.core_type = #tpu.core_type<tc>, window_params = [{transform_indices = @transform_0, window_bounds = array<i64: 2, 8>}, {transform_indices = @transform_1, window_bounds = array<i64: 2, 8>}, {transform_indices = @transform_2, window_bounds = array<i64: 1, 8, 128>}]} {
    %c0 = arith.constant 0 : index
    %c0_0 = arith.constant 0 : index
    %0 = vector.load %arg1[%c0, %c0_0] : memref<2x8xf32, #tpu.memory_space<vmem>>, vector<2x8xf32>
    %c0_1 = arith.constant 0 : index
    %c0_2 = arith.constant 0 : index
    %1 = vector.load %arg2[%c0_1, %c0_2] : memref<2x8xf32, #tpu.memory_space<vmem>>, vector<2x8xf32>
    %2 = arith.subf %0, %1 : vector<2x8xf32>
    %3 = arith.mulf %2, %2 : vector<2x8xf32>
    %4 = vector.shape_cast %3 : vector<2x8xf32> to vector<1x2x8xf32>
    %cst = arith.constant dense<0.000000e+00> : vector<1xf32>
    %5 = vector.multi_reduction <add>, %4, %cst [1, 2] : vector<1x2x8xf32> to vector<1xf32>
    %6 = vector.shape_cast %5 : vector<1xf32> to vector<1x1x1xf32>
    %7 = vector.extract %6[0, 0, 0] : f32 from vector<1x1x1xf32>
    %cst_3 = arith.constant dense<0.000000e+00> : vector<2xf32>
    %8 = vector.multi_reduction <add>, %0, %cst_3 [1] : vector<2x8xf32> to vector<2xf32>
    %9 = vector.shape_cast %8 : vector<2xf32> to vector<2x1xf32>
    %cst_4 = arith.constant 8.000000e+00 : f32
    %10 = vector.broadcast %cst_4 : f32 to vector<2x1xf32>
    %11 = arith.divf %9, %10 : vector<2x1xf32>
    %12 = vector.broadcast %11 : vector<2x1xf32> to vector<2x8xf32>
    %13 = arith.subf %0, %12 : vector<2x8xf32>
    %14 = arith.mulf %13, %13 : vector<2x8xf32>
    %cst_5 = arith.constant dense<0.000000e+00> : vector<2xf32>
    %15 = vector.multi_reduction <add>, %14, %cst_5 [1] : vector<2x8xf32> to vector<2xf32>
    %16 = vector.shape_cast %15 : vector<2xf32> to vector<2x1xf32>
    %cst_6 = arith.constant 7.000000e+00 : f32
    %17 = vector.broadcast %cst_6 : f32 to vector<2x1xf32>
    %18 = arith.divf %16, %17 : vector<2x1xf32>
    %19 = math.sqrt %18 : vector<2x1xf32>
    %cst_7 = arith.constant 9.99999997E-7 : f32
    %20 = vector.broadcast %cst_7 : f32 to vector<2x1xf32>
    %21 = arith.addf %19, %20 : vector<2x1xf32>
    %22 = arith.divf %11, %21 : vector<2x1xf32>
    %23 = vector.shape_cast %22 : vector<2x1xf32> to vector<1x2x1xf32>
    %cst_8 = arith.constant dense<0.000000e+00> : vector<1xf32>
    %24 = vector.multi_reduction <add>, %23, %cst_8 [1, 2] : vector<1x2x1xf32> to vector<1xf32>
    %25 = vector.shape_cast %24 : vector<1xf32> to vector<1x1x1xf32>
    %26 = vector.extract %25[0, 0, 0] : f32 from vector<1x1x1xf32>
    %cst_9 = arith.constant 0.000000e+00 : f32
    %27 = vector.broadcast %cst_9 : f32 to vector<2x8xf32>
    %28 = arith.minimumf %0, %27 : vector<2x8xf32>
    %29 = arith.mulf %28, %28 : vector<2x8xf32>
    %cst_10 = arith.constant dense<0.000000e+00> : vector<2xf32>
    %30 = vector.multi_reduction <add>, %29, %cst_10 [1] : vector<2x8xf32> to vector<2xf32>
    %31 = vector.shape_cast %30 : vector<2xf32> to vector<2x1xf32>
    %cst_11 = arith.constant 8.000000e+00 : f32
    %32 = vector.broadcast %cst_11 : f32 to vector<2x1xf32>
    %33 = arith.divf %31, %32 : vector<2x1xf32>
    %cst_12 = arith.constant 9.99999997E-7 : f32
    %34 = vector.broadcast %cst_12 : f32 to vector<2x1xf32>
    %35 = arith.addf %33, %34 : vector<2x1xf32>
    %36 = math.sqrt %35 : vector<2x1xf32>
    %37 = arith.divf %11, %36 : vector<2x1xf32>
    %38 = vector.shape_cast %37 : vector<2x1xf32> to vector<1x2x1xf32>
    %cst_13 = arith.constant dense<0.000000e+00> : vector<1xf32>
    %39 = vector.multi_reduction <add>, %38, %cst_13 [1, 2] : vector<1x2x1xf32> to vector<1xf32>
    %40 = vector.shape_cast %39 : vector<1xf32> to vector<1x1x1xf32>
    %41 = vector.extract %40[0, 0, 0] : f32 from vector<1x1x1xf32>
    %42 = tpu.iota {dimensions = array<i32: 1>} : vector<2x8xi32>
    %c1_i32 = arith.constant 1 : i32
    %43 = vector.broadcast %c1_i32 : i32 to vector<2x8xi32>
    %44 = arith.cmpi sge, %42, %43 : vector<2x8xi32>
    %cst_14 = arith.constant 0.000000e+00 : f32
    %45 = vector.broadcast %cst_14 : f32 to vector<2x1xf32>
    %46 = vector.extract_strided_slice %0 {offsets = [0, 0], sizes = [2, 7], strides = [1, 1]} : vector<2x8xf32> to vector<2x7xf32>
    %47 = tpu.concatenate %45, %46 in 1 : vector<2x1xf32>, vector<2x7xf32> -> vector<2x8xf32>
    %cst_15 = arith.constant 0.000000e+00 : f32
    %48 = vector.broadcast %cst_15 : f32 to vector<2x1xf32>
    %49 = vector.extract_strided_slice %0 {offsets = [0, 0], sizes = [2, 7], strides = [1, 1]} : vector<2x8xf32> to vector<2x7xf32>
    %50 = tpu.concatenate %48, %49 in 1 : vector<2x1xf32>, vector<2x7xf32> -> vector<2x8xf32>
    %51 = arith.addf %47, %0 : vector<2x8xf32>
    %52 = arith.select %44, %51, %0 : vector<2x8xi1>, vector<2x8xf32>
    %53 = arith.addf %47, %0 : vector<2x8xf32>
    %54 = arith.maximumf %50, %53 : vector<2x8xf32>
    %55 = arith.select %44, %54, %0 : vector<2x8xi1>, vector<2x8xf32>
    %c2_i32 = arith.constant 2 : i32
    %56 = vector.broadcast %c2_i32 : i32 to vector<2x8xi32>
    %57 = arith.cmpi sge, %42, %56 : vector<2x8xi32>
    %cst_16 = arith.constant 0.000000e+00 : f32
    %58 = vector.broadcast %cst_16 : f32 to vector<2x2xf32>
    %59 = vector.extract_strided_slice %52 {offsets = [0, 0], sizes = [2, 6], strides = [1, 1]} : vector<2x8xf32> to vector<2x6xf32>
    %60 = tpu.concatenate %58, %59 in 1 : vector<2x2xf32>, vector<2x6xf32> -> vector<2x8xf32>
    %cst_17 = arith.constant 0.000000e+00 : f32
    %61 = vector.broadcast %cst_17 : f32 to vector<2x2xf32>
    %62 = vector.extract_strided_slice %55 {offsets = [0, 0], sizes = [2, 6], strides = [1, 1]} : vector<2x8xf32> to vector<2x6xf32>
    %63 = tpu.concatenate %61, %62 in 1 : vector<2x2xf32>, vector<2x6xf32> -> vector<2x8xf32>
    %64 = arith.addf %60, %52 : vector<2x8xf32>
    %65 = arith.select %57, %64, %52 : vector<2x8xi1>, vector<2x8xf32>
    %66 = arith.addf %60, %55 : vector<2x8xf32>
    %67 = arith.maximumf %63, %66 : vector<2x8xf32>
    %68 = arith.select %57, %67, %55 : vector<2x8xi1>, vector<2x8xf32>
    %c4_i32 = arith.constant 4 : i32
    %69 = vector.broadcast %c4_i32 : i32 to vector<2x8xi32>
    %70 = arith.cmpi sge, %42, %69 : vector<2x8xi32>
    %cst_18 = arith.constant 0.000000e+00 : f32
    %71 = vector.broadcast %cst_18 : f32 to vector<2x4xf32>
    %72 = vector.extract_strided_slice %65 {offsets = [0, 0], sizes = [2, 4], strides = [1, 1]} : vector<2x8xf32> to vector<2x4xf32>
    %73 = tpu.concatenate %71, %72 in 1 : vector<2x4xf32>, vector<2x4xf32> -> vector<2x8xf32>
    %cst_19 = arith.constant 0.000000e+00 : f32
    %74 = vector.broadcast %cst_19 : f32 to vector<2x4xf32>
    %75 = vector.extract_strided_slice %68 {offsets = [0, 0], sizes = [2, 4], strides = [1, 1]} : vector<2x8xf32> to vector<2x4xf32>
    %76 = tpu.concatenate %74, %75 in 1 : vector<2x4xf32>, vector<2x4xf32> -> vector<2x8xf32>
    %77 = arith.addf %73, %65 : vector<2x8xf32>
    %78 = arith.select %70, %77, %65 : vector<2x8xi1>, vector<2x8xf32>
    %79 = arith.addf %73, %68 : vector<2x8xf32>
    %80 = arith.maximumf %76, %79 : vector<2x8xf32>
    %81 = arith.select %70, %80, %68 : vector<2x8xi1>, vector<2x8xf32>
    %82 = arith.subf %81, %78 : vector<2x8xf32>
    %cst_20 = arith.constant dense<0xFF800000> : vector<2xf32>
    %83 = vector.multi_reduction <maximumf>, %82, %cst_20 [1] : vector<2x8xf32> to vector<2xf32>
    %84 = vector.shape_cast %83 : vector<2xf32> to vector<2x1xf32>
    %85 = vector.shape_cast %84 : vector<2x1xf32> to vector<1x2x1xf32>
    %cst_21 = arith.constant dense<0.000000e+00> : vector<1xf32>
    %86 = vector.multi_reduction <add>, %85, %cst_21 [1, 2] : vector<1x2x1xf32> to vector<1xf32>
    %87 = vector.shape_cast %86 : vector<1xf32> to vector<1x1x1xf32>
    %88 = vector.extract %87[0, 0, 0] : f32 from vector<1x1x1xf32>
    %89 = vector.shape_cast %19 : vector<2x1xf32> to vector<1x2x1xf32>
    %cst_22 = arith.constant dense<0.000000e+00> : vector<1xf32>
    %90 = vector.multi_reduction <add>, %89, %cst_22 [1, 2] : vector<1x2x1xf32> to vector<1xf32>
    %91 = vector.shape_cast %90 : vector<1xf32> to vector<1x1x1xf32>
    %92 = vector.extract %91[0, 0, 0] : f32 from vector<1x1x1xf32>
    %93 = tpu.iota {dimensions = array<i32: 0>} : vector<8x128xi32>
    %cst_23 = arith.constant 0.000000e+00 : f32
    %94 = vector.broadcast %cst_23 : f32 to vector<8x128xf32>
    %c0_i32 = arith.constant 0 : i32
    %95 = vector.broadcast %c0_i32 : i32 to vector<8x128xi32>
    %96 = arith.cmpi eq, %93, %95 : vector<8x128xi32>
    %cst_24 = arith.constant 0.000000e+00 : f32
    %97 = vector.broadcast %7 : f32 to vector<8x128xf32>
    %98 = vector.broadcast %cst_24 : f32 to vector<8x128xf32>
    %99 = arith.select %96, %97, %98 : vector<8x128xi1>, vector<8x128xf32>
    %100 = arith.addf %94, %99 : vector<8x128xf32>
    %c1_i32_25 = arith.constant 1 : i32
    %101 = vector.broadcast %c1_i32_25 : i32 to vector<8x128xi32>
    %102 = arith.cmpi eq, %93, %101 : vector<8x128xi32>
    %cst_26 = arith.constant 0.000000e+00 : f32
    %103 = vector.broadcast %26 : f32 to vector<8x128xf32>
    %104 = vector.broadcast %cst_26 : f32 to vector<8x128xf32>
    %105 = arith.select %102, %103, %104 : vector<8x128xi1>, vector<8x128xf32>
    %106 = arith.addf %100, %105 : vector<8x128xf32>
    %c2_i32_27 = arith.constant 2 : i32
    %107 = vector.broadcast %c2_i32_27 : i32 to vector<8x128xi32>
    %108 = arith.cmpi eq, %93, %107 : vector<8x128xi32>
    %cst_28 = arith.constant 0.000000e+00 : f32
    %109 = vector.broadcast %41 : f32 to vector<8x128xf32>
    %110 = vector.broadcast %cst_28 : f32 to vector<8x128xf32>
    %111 = arith.select %108, %109, %110 : vector<8x128xi1>, vector<8x128xf32>
    %112 = arith.addf %106, %111 : vector<8x128xf32>
    %c3_i32 = arith.constant 3 : i32
    %113 = vector.broadcast %c3_i32 : i32 to vector<8x128xi32>
    %114 = arith.cmpi eq, %93, %113 : vector<8x128xi32>
    %cst_29 = arith.constant 0.000000e+00 : f32
    %115 = vector.broadcast %88 : f32 to vector<8x128xf32>
    %116 = vector.broadcast %cst_29 : f32 to vector<8x128xf32>
    %117 = arith.select %114, %115, %116 : vector<8x128xi1>, vector<8x128xf32>
    %118 = arith.addf %112, %117 : vector<8x128xf32>
    %c4_i32_30 = arith.constant 4 : i32
    %119 = vector.broadcast %c4_i32_30 : i32 to vector<8x128xi32>
    %120 = arith.cmpi eq, %93, %119 : vector<8x128xi32>
    %cst_31 = arith.constant 0.000000e+00 : f32
    %121 = vector.broadcast %92 : f32 to vector<8x128xf32>
    %122 = vector.broadcast %cst_31 : f32 to vector<8x128xf32>
    %123 = arith.select %120, %121, %122 : vector<8x128xi1>, vector<8x128xf32>
    %124 = arith.addf %118, %123 : vector<8x128xf32>
    %c0_32 = arith.constant 0 : index
    %c0_33 = arith.constant 0 : index
    %c0_34 = arith.constant 0 : index
    %125 = vector.load %arg3[%c0_32, %c0_33, %c0_34] : memref<1x8x128xf32, #tpu.memory_space<vmem>>, vector<1x8x128xf32>
    %126 = vector.shape_cast %125 : vector<1x8x128xf32> to vector<8x128xf32>
    %127 = vector.shape_cast %124 : vector<8x128xf32> to vector<1x8x128xf32>
    tpu.vector_store %arg3[%c0_32, %c0_33, %c0_34], %127 {strides = array<i32>} : memref<1x8x128xf32, #tpu.memory_space<vmem>>, vector<1x8x128xf32>,
    return
  }
  func.func @transform_0(%arg0: i32) -> (i32, i32) {
    %c0_i32 = arith.constant 0 : i32
    %c0_i32_0 = arith.constant 0 : i32
    return %arg0, %c0_i32 : i32, i32
  }
  func.func @transform_1(%arg0: i32) -> (i32, i32) {
    %c0_i32 = arith.constant 0 : i32
    %c0_i32_0 = arith.constant 0 : i32
    return %arg0, %c0_i32 : i32, i32
  }
  func.func @transform_2(%arg0: i32) -> (i32, i32, i32) {
    %c0_i32 = arith.constant 0 : i32
    %c0_i32_0 = arith.constant 0 : i32
    %c0_i32_1 = arith.constant 0 : i32
    return %arg0, %c0_i32, %c0_i32_0 : i32, i32, i32
  }
}

</mosaic_0001>

<llo_original>
// kernel: tpu_custom_call.1
$region0: #{tpu_custom_call.1}
  #allocation0 [shape = 'u32[]', space=smem, size = 0x4, offset = 0x4, fixed_abs, tag = 'smem constant byte address 0x4 - core index']
  #allocation1 [shape = 'u32[144,128]{1,0:T(1,128)}', space=vmem, size = 0x12000, scoped, tag = 'internal scratch']
  %s0 = inlined_call_operand.hbm [shape: f32[2,8], index: 0, kind: input, shape index: {}]
  %s1 = inlined_call_operand.vmem [shape: f32[2,8], index: 1, kind: input, shape index: {}]
  %s2 = inlined_call_operand.hbm [shape: f32[1,8,128], index: 2, kind: output, shape index: {}]
  %s3 = sld [smem:[#allocation0]]
  $region22: #{tpu_custom_call.1} parent=0
    _
  %s5 = ssub.s32 1, %s3
  %s6 = scalar_select 0, %s5, %s3
  $region1: #{tpu_custom_call.1} parent=0
    #allocation2 [shape = 'u8[1024]{0}', space=vmem, size = 0x400, scoped, tag = 'input window, operand 0, single buffered']
    #allocation3 [shape = 's32[1]{0}', space=sflag, size = 0x4, scoped, tag = 'scoped memory for tpu_custom_call.1']
    #allocation4 [shape = 's32[1]{0}', space=sflag, size = 0x4, scoped, tag = 'scoped memory for tpu_custom_call.1']
    #allocation5 [shape = 'u8[4096]{0}', space=vmem, size = 0x1000, scoped, tag = 'output window, operand 0, single buffered']
    %7 = vsyncpa [#allocation3], 0
    %8 = vsyncpa [#allocation4], 0
    // Predicated region
    $region2: #{tpu_custom_call.1} parent=1 // pred_check
      _
    $region3: #{tpu_custom_call.1} parent=1 // pred_check_branch
      %10 = sbr.rel (0) target = $region5
    $region4: #{tpu_custom_call.1} parent=1 // pred_region
      %s12 = ssub.s32 32, 32
      %13 = vsyncadd [#allocation3], %s12
      %s15 = sshll.u32 [#allocation2], 4
      %s16 = int_to_ptr.vmem [resolvable:$true] %s15
      %18 = dma.hbm_to_vmem [thread:$0]  %s0, 32, %s16, [#allocation3]
    $region5: #{tpu_custom_call.1} parent=1 // pred_fallthru
      _
    // Predicated region
    $region6: #{tpu_custom_call.1} parent=1 // pred_check
      _
    $region7: #{tpu_custom_call.1} parent=1 // pred_check_branch
      %20 = sbr.rel (0) target = $region9
    $region8: #{tpu_custom_call.1} parent=1 // pred_region
      _
    $region9: #{tpu_custom_call.1} parent=1 // pred_fallthru
      _
    // Predicated region
    $region10: #{tpu_custom_call.1} parent=1 // pred_check
      _
    $region11: #{tpu_custom_call.1} parent=1 // pred_check_branch
      %22 = sbr.rel (0) target = $region13
    $region12: #{tpu_custom_call.1} parent=1 // pred_region
      %23 = dma.done [#allocation3], 32
    $region13: #{tpu_custom_call.1} parent=1 // pred_fallthru
      _
    %v24 = vld [vmem:[#allocation2] sm:$0x3]
    %v25 = vld [vmem:[%s1] sm:$0x3]
    %v26 = vsub.f32 %v24, %v25
    %v27 = vmul.f32 %v26, %v26
    %vm28 = vcmask 58368
    %v29 = vsel %vm28, %v27, 0.0
    %30 = vadd.xlane.f32.xlu0 %v29
    %v31 = vpop.xlane.xlu0 %30
    %v32 = vrot.slane %v31, 4
    %v33 = vadd.f32 %v31, %v32
    %v34 = vrot.slane %v33, 2
    %v35 = vadd.f32 %v33, %v34
    %v36 = vrot.slane %v35, 1
    %v37 = vadd.f32 %v35, %v36
    %s38 = vtos %v37
    %v39 = vsel %vm28, %v24, 0.0
    %40 = vadd.xlane.f32.xlu0 %v39
    %v41 = vpop.xlane.xlu0 %40
    %v42 = vrcp.pop 8.0
    %v43 = vmul.f32 %v41, %v42
    %v44 = vsub.f32 %v24, %v43
    %v45 = vmul.f32 %v44, %v44
    %v46 = vsel %vm28, %v45, 0.0
    %47 = vadd.xlane.f32.xlu0 %v46
    %v48 = vpop.xlane.xlu0 %47
    %v49 = vrcp.pop 7.0
    %v50 = vmul.f32 %v48, %v49
    %v51 = vrsqrt.pop %v50
    %v52 = vmul.f32 %v50, %v51
    %vm53 = vcmp.eq.f32.partialorder %v50, inf
    %v54 = vsel %vm53, %v50, %v52
    %vm55 = vcmp.eq.f32.partialorder %v50, 0.0
    %v56 = vand.u32 %v50, 2147483648
    %v57 = vsel %vm55, %v56, %v54
    %v58 = vadd.f32 %v57, 1e-06
    %v59 = vrcp.pop %v58
    %v60 = vmul.f32 %v43, %v59
    %vm61 = vcmask 1024
    %v62 = vsel %vm61, %v60, 0.0
    %63 = vadd.xlane.f32.xlu0 %v62
    %v64 = vpop.xlane.xlu0 %63
    %v65 = vrot.slane %v64, 4
    %v66 = vadd.f32 %v64, %v65
    %v67 = vrot.slane %v66, 2
    %v68 = vadd.f32 %v66, %v67
    %v69 = vrot.slane %v68, 1
    %v70 = vadd.f32 %v68, %v69
    %s71 = vtos %v70
    %v72 = vmin.f32 %v24, 0.0
    %v73 = vmul.f32 %v72, %v72
    %v74 = vsel %vm28, %v73, 0.0
    %75 = vadd.xlane.f32.xlu0 %v74
    %v76 = vpop.xlane.xlu0 %75
    %v77 = vmul.f32 %v76, %v42
    %v78 = vadd.f32 %v77, 1e-06
    %v79 = vrsqrt.pop %v78
    %v80 = vmul.f32 %v78, %v79
    %vm81 = vcmp.eq.f32.partialorder %v78, inf
    %v82 = vsel %vm81, %v78, %v80
    %vm83 = vcmp.eq.f32.partialorder %v78, 0.0
    %v84 = vand.u32 %v78, 2147483648
    %v85 = vsel %vm83, %v84, %v82
    %v86 = vrcp.pop %v85
    %v87 = vmul.f32 %v43, %v86
    %v88 = vsel %vm61, %v87, 0.0
    %89 = vadd.xlane.f32.xlu0 %v88
    %v90 = vpop.xlane.xlu0 %89
    %v91 = vrot.slane %v90, 4
    %v92 = vadd.f32 %v90, %v91
    %v93 = vrot.slane %v92, 2
    %v94 = vadd.f32 %v92, %v93
    %v95 = vrot.slane %v94, 1
    %v96 = vadd.f32 %v94, %v95
    %s97 = vtos %v96
    %v98 = vlaneseq
    %v99 = vand.u32 %v98, 127
    %vm100 = vcmp.ge.s32.totalorder %v99, 1
    %102 = vrot.lane.b32.xlu0 %v24, 1
    %v103 = vpop.permute.xlu0 %102
    %vm105 = vcmask 7168
    %v106 = vsel %vm105, 0.0, %v103
    %v107 = vadd.f32 %v106, %v24
    %v108 = vsel %vm100, %v107, %v24
    %v109 = vmax.f32 %v106, %v107
    %v110 = vsel %vm100, %v109, %v24
    %vm111 = vcmp.ge.s32.totalorder %v99, 2
    %113 = vrot.lane.b32.xlu0 %v108, 2
    %v114 = vpop.permute.xlu0 %113
    %vm116 = vcmask 15360
    %v117 = vsel %vm116, 0.0, %v114
    %119 = vrot.lane.b32.xlu0 %v110, 2
    %v120 = vpop.permute.xlu0 %119
    %v122 = vsel %vm116, 0.0, %v120
    %v123 = vadd.f32 %v117, %v108
    %v124 = vsel %vm111, %v123, %v108
    %v125 = vadd.f32 %v117, %v110
    %v126 = vmax.f32 %v122, %v125
    %v127 = vsel %vm111, %v126, %v110
    %vm128 = vcmp.ge.s32.totalorder %v99, 4
    %130 = vrot.lane.b32.xlu0 %v124, 4
    %v131 = vpop.permute.xlu0 %130
    %vm133 = vcmask 31744
    %v134 = vsel %vm133, 0.0, %v131
    %136 = vrot.lane.b32.xlu0 %v127, 4
    %v137 = vpop.permute.xlu0 %136
    %v139 = vsel %vm133, 0.0, %v137
    %v140 = vadd.f32 %v134, %v124
    %v141 = vsel %vm128, %v140, %v124
    %v142 = vadd.f32 %v134, %v127
    %v143 = vmax.f32 %v139, %v142
    %v144 = vsel %vm128, %v143, %v127
    %v145 = vsub.f32 %v144, %v141
    %v146 = vsel %vm28, %v145, -inf
    %147 = vmax.xlane.f32.xlu0 %v146
    %v148 = vpop.xlane.xlu0 %147
    %v149 = vsel %vm61, %v148, 0.0
    %150 = vadd.xlane.f32.xlu0 %v149
    %v151 = vpop.xlane.xlu0 %150
    %v152 = vrot.slane %v151, 4
    %v153 = vadd.f32 %v151, %v152
    %v154 = vrot.slane %v153, 2
    %v155 = vadd.f32 %v153, %v154
    %v156 = vrot.slane %v155, 1
    %v157 = vadd.f32 %v155, %v156
    %s158 = vtos %v157
    %v159 = vsel %vm61, %v57, 0.0
    %160 = vadd.xlane.f32.xlu0 %v159
    %v161 = vpop.xlane.xlu0 %160
    %v162 = vrot.slane %v161, 4
    %v163 = vadd.f32 %v161, %v162
    %v164 = vrot.slane %v163, 2
    %v165 = vadd.f32 %v163, %v164
    %v166 = vrot.slane %v165, 1
    %v167 = vadd.f32 %v165, %v166
    %s168 = vtos %v167
    %v169 = vlaneseq
    %v170 = vshrl.u32 %v169, 7
    %vm171 = vcmp.eq.s32.totalorder %v170, 0
    %v172 = vstv %s38
    %v173 = vsel %vm171, %v172, 0.0
    %v174 = vadd.f32 %v173, 0.0
    %vm175 = vcmp.eq.s32.totalorder %v170, 1
    %v176 = vstv %s71
    %v177 = vsel %vm175, %v176, 0.0
    %v178 = vadd.f32 %v174, %v177
    %vm179 = vcmp.eq.s32.totalorder %v170, 2
    %v180 = vstv %s97
    %v181 = vsel %vm179, %v180, 0.0
    %v182 = vadd.f32 %v178, %v181
    %vm183 = vcmp.eq.s32.totalorder %v170, 3
    %v184 = vstv %s158
    %v185 = vsel %vm183, %v184, 0.0
    %v186 = vadd.f32 %v182, %v185
    %vm187 = vcmp.eq.s32.totalorder %v170, 4
    %v188 = vstv %s168
    %v189 = vsel %vm187, %v188, 0.0
    %v190 = vadd.f32 %v186, %v189
    %191 = vst [vmem:[#allocation5] sm:$0xff] %v190
    // Predicated region
    $region14: #{tpu_custom_call.1} parent=1 // pred_check
      _
    $region15: #{tpu_custom_call.1} parent=1 // pred_check_branch
      %193 = sbr.rel (0) target = $region17
    $region16: #{tpu_custom_call.1} parent=1 // pred_region
      %s195 = ssub.s32 128, 128
      %196 = vsyncadd [#allocation4], %s195
      %s198 = sshll.u32 [#allocation5], 4
      %s199 = int_to_ptr.vmem [resolvable:$true] %s198
      %201 = dma.vmem_to_hbm [thread:$0]  %s199, 128, %s2, [#allocation4]
    $region17: #{tpu_custom_call.1} parent=1 // pred_fallthru
      _
    // Predicated region
    $region18: #{tpu_custom_call.1} parent=1 // pred_check
      _
    $region19: #{tpu_custom_call.1} parent=1 // pred_check_branch
      %203 = sbr.rel (0) target = $region21
    $region20: #{tpu_custom_call.1} parent=1 // pred_region
      %204 = dma.done [#allocation4], 128
    $region21: #{tpu_custom_call.1} parent=1 // pred_fallthru
      _
    %205 = vsyncpa [#allocation3], 1
    %206 = vsyncpa [#allocation4], 1

</llo_original>
